<compile_context>
chip_gen: v5e
topology: v5e:2x2
jax: 0.10.0
libtpu: 0.0.40
codegen_flags: <defaults>
</compile_context>

<pallas_src>
import jax
import jax.numpy as jnp
from jax.experimental import pallas as pl
from jax.experimental.pallas import tpu as pltpu


def _query_summarizer_kernel(
    tokens_ref,    # [Bt, N, E]   (compute dtype: f32 or bf16)
    qmaskT_ref,    # [E, K*H]     f32  (scale * per-head-masked q projection)^T
    expand_ref,    # [K*H, K*E]   f32  0/1 head -> lane-range expansion matrix
    wkT_ref,       # [E, E]       Wk^T (pre-transposed, compute dtype)
    wvT_ref,       # [E, E]       Wv^T
    bv_ref,        # [1, E]       f32
    woT_ref,       # [E, E]       Wo^T
    bo_ref,        # [1, E]       f32
    out_ref,       # [Bt, K, E]
):
    bt, n, e = tokens_ref.shape
    k = out_ref.shape[1]
    kh = qmaskT_ref.shape[1]

    x = tokens_ref[...].reshape(bt * n, e)            # flatten batch*tokens rows

    # K / V projections: big (Bt*N, E) x (E, E) MXU matmuls, f32 accumulation.
    # bk is intentionally dropped (softmax shift invariance makes it exact).
    kp = jnp.dot(x, wkT_ref[...], preferred_element_type=jnp.float32)             # [Bt*N, E]
    v = jnp.dot(x, wvT_ref[...], preferred_element_type=jnp.float32) + bv_ref[...]  # [Bt*N, E]

    # Scores for ALL heads (and all K query rows) in one matmul:
    #   s[(b,n), k*H+h] = scale * <q_proj[k, head h], kp[(b,n), head h]>
    s = jnp.dot(kp, qmaskT_ref[...], preferred_element_type=jnp.float32)          # [Bt*N, K*H]
    s = s.reshape(bt, n, kh)

    # Softmax over the token axis (per batch element / head / query), f32.
    m = jnp.max(s, axis=1, keepdims=True)
    p = jnp.exp(s - m)
    denom = jnp.sum(p, axis=1, keepdims=True)
    attn = p * pl.reciprocal(denom, approx=True)                                   # [Bt, N, K*H]
    # TODO(synk): attention dropout omitted (inference / eval-mode identity).

    # Broadcast each head's weight across that head's lane range with a 0/1
    # expansion matmul (no per-head loop, no lane concat), then weighted sum
    # over tokens on the VPU.
    a_e = jnp.dot(attn.reshape(bt * n, kh), expand_ref[...],
                  preferred_element_type=jnp.float32)                              # [Bt*N, K*E]

    if k == 1:
        ctx = jnp.sum((a_e * v).reshape(bt, n, e), axis=1)                          # [Bt, E]
        summary = jnp.dot(ctx.astype(woT_ref.dtype), woT_ref[...],
                          preferred_element_type=jnp.float32) + bo_ref[...]         # [Bt, E]
        out_ref[:, 0, :] = summary.astype(out_ref.dtype)
    else:
        a_e = a_e.reshape(bt, n, k, e)
        ctx = jnp.sum(a_e * v.reshape(bt, n, 1, e), axis=1)                         # [Bt, K, E]
        summary = jnp.dot(ctx.reshape(bt * k, e).astype(woT_ref.dtype),
                          woT_ref[...],
                          preferred_element_type=jnp.float32) + bo_ref[...]         # [Bt*K, E]
        out_ref[...] = summary.reshape(bt, k, e).astype(out_ref.dtype)


def _pick_batch_tile(B, N, target_rows=512, max_rows=4096):
    """Largest divisor of B whose Bt*N stays under max_rows, stopping once we
    reach ~target_rows (enough to fill MXU row tiles)."""
    best = 1
    for bt in range(1, B + 1):
        if B % bt:
            continue
        if bt * N <= max_rows:
            best = bt
        if bt * N >= target_rows:
            break
    return best


def query_summarizer_forward(tokens, params, k: int = 1, num_heads: int = 4,
                             compute_dtype=jnp.float32, batch_tile=None):
    """tokens: [B, N, E].  Returns summary tokens [B, k, E]."""
    B, N, E = tokens.shape
    H = num_heads
    D = E // H
    assert D * H == E, "embedding_dim must be divisible by num_heads"

    # Degenerate paths handled in plain JAX glue (no compute worth a kernel).
    if N <= k:
        if N < k:
            pad = jnp.zeros((B, k - N, E), dtype=tokens.dtype)
            return jnp.concatenate([tokens, pad], axis=1)
        return tokens

    out_dtype = tokens.dtype
    f32 = jnp.float32

    # ---------------- Host-side, batch-invariant preprocessing ----------------
    query = (params["query_vectors_k"] if k > 1 else params["query_vectors"])[:k]  # [k, E]
    # Hoisted query projection (computed once, not once per batch element).
    q_proj = query @ params["wq"].T + params["bq"]                                  # [k, E]

    scale = 1.0 / (D ** 0.5)
    head_of = jnp.arange(E, dtype=jnp.int32) // D                                   # lane -> head
    col_h = jnp.arange(k * H, dtype=jnp.int32) % H
    col_k = jnp.arange(k * H, dtype=jnp.int32) // H
    head_mask = (head_of[:, None] == col_h[None, :]).astype(f32)                    # [E, kH]
    # qmaskT[e, kq*H + h] = scale * q_proj[kq, e] * [e belongs to head h]
    qmaskT = (jnp.take(q_proj, col_k, axis=0).T * head_mask * scale).astype(f32)    # [E, kH]

    out_col_k = jnp.arange(k * E, dtype=jnp.int32) // E
    out_col_e = jnp.arange(k * E, dtype=jnp.int32) % E
    expand = ((col_k[:, None] == out_col_k[None, :]) &
              (col_h[:, None] == head_of[out_col_e][None, :])).astype(f32)          # [kH, kE]

    # Pre-transposed weights ([in, out]) so the kernel does x @ W^T without any
    # runtime transpose.  bf16 option halves weight/token DMA; accum stays f32.
    wkT = params["wk"].T.astype(compute_dtype)
    wvT = params["wv"].T.astype(compute_dtype)
    woT = params["wo"].T.astype(compute_dtype)
    bv = params["bv"].astype(f32)
    bo = params["bo"].astype(f32)
    tokens_c = tokens.astype(compute_dtype)
    # bk is dropped on purpose (exact under softmax shift-invariance).

    # ---------------- Batch tiling ----------------
    if batch_tile is None:
        batch_tile = _pick_batch_tile(B, N)
    if N % 8 != 0:
        batch_tile = 1   # keep in-kernel (Bt*N, E) <-> (Bt, N, E) reshapes layout-trivial
    Bt = batch_tile
    assert B % Bt == 0

    kh = k * H
    # Explicit VMEM budget (v7x has only 64 MiB physical); for small problems
    # this equals the 32 MiB default.
    w_itm = jnp.dtype(compute_dtype).itemsize
    weight_bytes = 3 * E * E * w_itm + 2 * E * 4 + E * kh * 4 + kh * k * E * 4
    block_bytes = Bt * N * E * w_itm + Bt * k * E * jnp.dtype(out_dtype).itemsize
    vmem_limit = int(min(max(2 * (weight_bytes + block_bytes) + (8 << 20), 32 << 20),
                         64 << 20))

    const2 = lambda b: (0, 0)

    out = pl.pallas_call(
        _query_summarizer_kernel,
        out_shape=jax.ShapeDtypeStruct((B, k, E), out_dtype),
        grid_spec=pltpu.PrefetchScalarGridSpec(
            num_scalar_prefetch=0,
            grid=(B // Bt,),
            in_specs=[
                pl.BlockSpec((Bt, N, E), lambda b: (b, 0, 0)),   # tokens (batch-tiled)
                pl.BlockSpec((E, kh), const2),                   # qmaskT
                pl.BlockSpec((kh, k * E), const2),               # head expansion
                pl.BlockSpec((E, E), const2),                    # Wk^T
                pl.BlockSpec((E, E), const2),                    # Wv^T
                pl.BlockSpec((1, E), const2),                    # bv
                pl.BlockSpec((E, E), const2),                    # Wo^T
                pl.BlockSpec((1, E), const2),                    # bo
            ],
            out_specs=pl.BlockSpec((Bt, k, E), lambda b: (b, 0, 0)),
        ),
        compiler_params=pltpu.CompilerParams(
            dimension_semantics=("parallel",),
            vmem_limit_bytes=vmem_limit,
        ),
    )(tokens_c, qmaskT, expand, wkT, wvT, bv, woT, bo)
    return out


def init_params(key, embedding_dim: int, k: int = 1):
    """Synthetic params in nn.Linear convention: W=[out,in], b=[1,out]."""
    E = embedding_dim
    ks = jax.random.split(key, 10)
    s = 1.0 / (E ** 0.5)
    return {
        "wq": jax.random.normal(ks[0], (E, E), jnp.float32) * s,
        "bq": jax.random.normal(ks[1], (1, E), jnp.float32) * 0.01,
        "wk": jax.random.normal(ks[2], (E, E), jnp.float32) * s,
        "bk": jax.random.normal(ks[3], (1, E), jnp.float32) * 0.01,
        "wv": jax.random.normal(ks[4], (E, E), jnp.float32) * s,
        "bv": jax.random.normal(ks[5], (1, E), jnp.float32) * 0.01,
        "wo": jax.random.normal(ks[6], (E, E), jnp.float32) * s,
        "bo": jax.random.normal(ks[7], (1, E), jnp.float32) * 0.01,
        "query_vectors": jax.random.normal(ks[8], (1, E), jnp.float32) * s,
        "query_vectors_k": jax.random.normal(ks[9], (max(k, 1), E), jnp.float32) * s,
    }


def _reference_forward(tokens, params, k: int, num_heads: int):
    """Pure-JAX reference mirroring the PyTorch forward (dropout=identity).
    Note: it DOES include bk; the kernel drops bk, which is exact."""
    B, N, E = tokens.shape
    D = E // num_heads
    query = (params["query_vectors_k"] if k > 1 else params["query_vectors"])[:k]
    query = jnp.broadcast_to(query[None], (B, k, E))
    q = query @ params["wq"].T + params["bq"]
    kp = tokens @ params["wk"].T + params["bk"]
    v = tokens @ params["wv"].T + params["bv"]
    q = q.reshape(B, k, num_heads, D).transpose(0, 2, 1, 3)
    kp = kp.reshape(B, N, num_heads, D).transpose(0, 2, 1, 3)
    v = v.reshape(B, N, num_heads, D).transpose(0, 2, 1, 3)
    scores = jnp.einsum("bhqd,bhnd->bhqn", q, kp) / (D ** 0.5)
    attn = jax.nn.softmax(scores, axis=-1)
    out = jnp.einsum("bhqn,bhnd->bhqd", attn, v)
    out = out.transpose(0, 2, 1, 3).reshape(B, k, E)
    return out @ params["wo"].T + params["bo"]


if __name__ == "__main__":
    B, N, E = 2, 8, 32
    NUM_HEADS = 4
    K_SUMMARY = 1

    key = jax.random.PRNGKey(0)
    k_tok, k_par = jax.random.split(key)
    tokens = jax.random.normal(k_tok, (B, N, E), jnp.float32)
    params = init_params(k_par, E, k=K_SUMMARY)

    ref = _reference_forward(tokens, params, K_SUMMARY, NUM_HEADS)

    # f32 path (v5e default): tight check (approx reciprocal => ~1e-4 level).
    out = query_summarizer_forward(tokens, params, k=K_SUMMARY, num_heads=NUM_HEADS)
    out = jax.block_until_ready(out)
    assert out.shape == (B, K_SUMMARY, E), out.shape
    assert jnp.allclose(out, ref, atol=5e-3, rtol=5e-3), "f32 kernel mismatch vs reference"

    # bf16 MXU path (v6e/v7x roofline): relaxed tolerance.
    out_bf16 = jax.block_until_ready(
        query_summarizer_forward(tokens, params, k=K_SUMMARY, num_heads=NUM_HEADS,
                                 compute_dtype=jnp.bfloat16))
    assert jnp.allclose(out_bf16, ref, atol=5e-2, rtol=5e-2), "bf16 kernel mismatch vs reference"

    print("KERNEL_OK")
</pallas_src>

<mosaic_0001>
module attributes {stable_mosaic.version = 11 : i64} {
  func.func @_query_summarizer_kernel(%arg0: i32, %arg1: memref<2x8x32xf32, #tpu.memory_space<vmem>>, %arg2: memref<32x4xf32, #tpu.memory_space<vmem>>, %arg3: memref<4x32xf32, #tpu.memory_space<vmem>>, %arg4: memref<32x32xf32, #tpu.memory_space<vmem>>, %arg5: memref<32x32xf32, #tpu.memory_space<vmem>>, %arg6: memref<1x32xf32, #tpu.memory_space<vmem>>, %arg7: memref<32x32xf32, #tpu.memory_space<vmem>>, %arg8: memref<1x32xf32, #tpu.memory_space<vmem>>, %arg9: memref<2x1x32xf32, #tpu.memory_space<vmem>>) attributes {dimension_semantics = [#tpu.dimension_semantics<parallel>], iteration_bounds = array<i64: 1>, scalar_prefetch = 0 : i64, scratch_operands = 0 : i64, tpu.core_type = #tpu.core_type<tc>, window_params = [{transform_indices = @transform_0, window_bounds = array<i64: 2, 8, 32>}, {pipeline_mode = #tpu.pipeline_mode<synchronous>, transform_indices = @transform_1, window_bounds = array<i64: 32, 4>}, {pipeline_mode = #tpu.pipeline_mode<synchronous>, transform_indices = @transform_2, window_bounds = array<i64: 4, 32>}, {pipeline_mode = #tpu.pipeline_mode<synchronous>, transform_indices = @transform_3, window_bounds = array<i64: 32, 32>}, {pipeline_mode = #tpu.pipeline_mode<synchronous>, transform_indices = @transform_4, window_bounds = array<i64: 32, 32>}, {pipeline_mode = #tpu.pipeline_mode<synchronous>, transform_indices = @transform_5, window_bounds = array<i64: 1, 32>}, {pipeline_mode = #tpu.pipeline_mode<synchronous>, transform_indices = @transform_6, window_bounds = array<i64: 32, 32>}, {pipeline_mode = #tpu.pipeline_mode<synchronous>, transform_indices = @transform_7, window_bounds = array<i64: 1, 32>}, {transform_indices = @transform_8, window_bounds = array<i64: 2, 1, 32>}]} {
    %c0 = arith.constant 0 : index
    %c0_0 = arith.constant 0 : index
    %c0_1 = arith.constant 0 : index
    %0 = vector.load %arg1[%c0, %c0_0, %c0_1] : memref<2x8x32xf32, #tpu.memory_space<vmem>>, vector<2x8x32xf32>
    %1 = vector.shape_cast %0 : vector<2x8x32xf32> to vector<16x32xf32>
    %c0_2 = arith.constant 0 : index
    %c0_3 = arith.constant 0 : index
    %2 = vector.load %arg4[%c0_2, %c0_3] : memref<32x32xf32, #tpu.memory_space<vmem>>, vector<32x32xf32>
    %cst = arith.constant dense<0.000000e+00> : vector<16x32xf32>
    %3 = tpu.matmul %1, %2, %cst {dimension_numbers = #tpu.dot_dimension_numbers<[1], [0], [0], [1], [0, 0, 1, 1], [], []>} : vector<16x32xf32>, vector<32x32xf32>, vector<16x32xf32> -> vector<16x32xf32>
    %c0_4 = arith.constant 0 : index
    %c0_5 = arith.constant 0 : index
    %4 = vector.load %arg5[%c0_4, %c0_5] : memref<32x32xf32, #tpu.memory_space<vmem>>, vector<32x32xf32>
    %cst_6 = arith.constant dense<0.000000e+00> : vector<16x32xf32>
    %5 = tpu.matmul %1, %4, %cst_6 {dimension_numbers = #tpu.dot_dimension_numbers<[1], [0], [0], [1], [0, 0, 1, 1], [], []>} : vector<16x32xf32>, vector<32x32xf32>, vector<16x32xf32> -> vector<16x32xf32>
    %c0_7 = arith.constant 0 : index
    %c0_8 = arith.constant 0 : index
    %6 = vector.load %arg6[%c0_7, %c0_8] : memref<1x32xf32, #tpu.memory_space<vmem>>, vector<1x32xf32>
    %7 = vector.broadcast %6 : vector<1x32xf32> to vector<16x32xf32>
    %8 = arith.addf %5, %7 : vector<16x32xf32>
    %c0_9 = arith.constant 0 : index
    %c0_10 = arith.constant 0 : index
    %9 = vector.load %arg2[%c0_9, %c0_10] : memref<32x4xf32, #tpu.memory_space<vmem>>, vector<32x4xf32>
    %cst_11 = arith.constant dense<0.000000e+00> : vector<16x4xf32>
    %10 = tpu.matmul %3, %9, %cst_11 {dimension_numbers = #tpu.dot_dimension_numbers<[1], [0], [0], [1], [0, 0, 1, 1], [], []>} : vector<16x32xf32>, vector<32x4xf32>, vector<16x4xf32> -> vector<16x4xf32>
    %11 = vector.shape_cast %10 : vector<16x4xf32> to vector<2x8x4xf32>
    %cst_12 = arith.constant dense<0xFF800000> : vector<2x4xf32>
    %12 = vector.multi_reduction <maximumf>, %11, %cst_12 [1] : vector<2x8x4xf32> to vector<2x4xf32>
    %13 = vector.shape_cast %12 : vector<2x4xf32> to vector<2x1x4xf32>
    %14 = vector.broadcast %13 : vector<2x1x4xf32> to vector<2x8x4xf32>
    %15 = arith.subf %11, %14 : vector<2x8x4xf32>
    %16 = math.exp %15 : vector<2x8x4xf32>
    %cst_13 = arith.constant dense<0.000000e+00> : vector<2x4xf32>
    %17 = vector.multi_reduction <add>, %16, %cst_13 [1] : vector<2x8x4xf32> to vector<2x4xf32>
    %18 = vector.shape_cast %17 : vector<2x4xf32> to vector<2x1x4xf32>
    %19 = tpu.reciprocal %18 {approx = true} : vector<2x1x4xf32> -> vector<2x1x4xf32>
    %20 = vector.broadcast %19 : vector<2x1x4xf32> to vector<2x8x4xf32>
    %21 = arith.mulf %16, %20 : vector<2x8x4xf32>
    %22 = vector.shape_cast %21 : vector<2x8x4xf32> to vector<16x4xf32>
    %c0_14 = arith.constant 0 : index
    %c0_15 = arith.constant 0 : index
    %23 = vector.load %arg3[%c0_14, %c0_15] : memref<4x32xf32, #tpu.memory_space<vmem>>, vector<4x32xf32>
    %cst_16 = arith.constant dense<0.000000e+00> : vector<16x32xf32>
    %24 = tpu.matmul %22, %23, %cst_16 {dimension_numbers = #tpu.dot_dimension_numbers<[1], [0], [0], [1], [0, 0, 1, 1], [], []>} : vector<16x4xf32>, vector<4x32xf32>, vector<16x32xf32> -> vector<16x32xf32>
    %25 = arith.mulf %24, %8 : vector<16x32xf32>
    %26 = vector.shape_cast %25 : vector<16x32xf32> to vector<2x8x32xf32>
    %cst_17 = arith.constant dense<0.000000e+00> : vector<2x32xf32>
    %27 = vector.multi_reduction <add>, %26, %cst_17 [1] : vector<2x8x32xf32> to vector<2x32xf32>
    %c0_18 = arith.constant 0 : index
    %c0_19 = arith.constant 0 : index
    %28 = vector.load %arg7[%c0_18, %c0_19] : memref<32x32xf32, #tpu.memory_space<vmem>>, vector<32x32xf32>
    %cst_20 = arith.constant dense<0.000000e+00> : vector<2x32xf32>
    %29 = tpu.matmul %27, %28, %cst_20 {dimension_numbers = #tpu.dot_dimension_numbers<[1], [0], [0], [1], [0, 0, 1, 1], [], []>} : vector<2x32xf32>, vector<32x32xf32>, vector<2x32xf32> -> vector<2x32xf32>
    %c0_21 = arith.constant 0 : index
    %c0_22 = arith.constant 0 : index
    %30 = vector.load %arg8[%c0_21, %c0_22] : memref<1x32xf32, #tpu.memory_space<vmem>>, vector<1x32xf32>
    %31 = vector.broadcast %30 : vector<1x32xf32> to vector<2x32xf32>
    %32 = arith.addf %29, %31 : vector<2x32xf32>
    %c0_23 = arith.constant 0 : index
    %c0_24 = arith.constant 0 : index
    %c0_25 = arith.constant 0 : index
    %33 = vector.load %arg9[%c0_23, %c0_24, %c0_25] : memref<2x1x32xf32, #tpu.memory_space<vmem>>, vector<2x1x32xf32>
    %34 = vector.shape_cast %33 : vector<2x1x32xf32> to vector<2x32xf32>
    %35 = vector.shape_cast %32 : vector<2x32xf32> to vector<2x1x32xf32>
    tpu.vector_store %arg9[%c0_23, %c0_24, %c0_25], %35 {strides = array<i32>} : memref<2x1x32xf32, #tpu.memory_space<vmem>>, vector<2x1x32xf32>,
    return
  }
  func.func @transform_0(%arg0: i32) -> (i32, i32, i32) {
    %c0_i32 = arith.constant 0 : i32
    %c0_i32_0 = arith.constant 0 : i32
    %c0_i32_1 = arith.constant 0 : i32
    return %arg0, %c0_i32, %c0_i32_0 : i32, i32, i32
  }
  func.func @transform_1(%arg0: i32) -> (i32, i32) {
    %c0_i32 = arith.constant 0 : i32
    %c0_i32_0 = arith.constant 0 : i32
    %c0_i32_1 = arith.constant 0 : i32
    return %c0_i32, %c0_i32_0 : i32, i32
  }
  func.func @transform_2(%arg0: i32) -> (i32, i32) {
    %c0_i32 = arith.constant 0 : i32
    %c0_i32_0 = arith.constant 0 : i32
    %c0_i32_1 = arith.constant 0 : i32
    return %c0_i32, %c0_i32_0 : i32, i32
  }
  func.func @transform_3(%arg0: i32) -> (i32, i32) {
    %c0_i32 = arith.constant 0 : i32
    %c0_i32_0 = arith.constant 0 : i32
    %c0_i32_1 = arith.constant 0 : i32
    return %c0_i32, %c0_i32_0 : i32, i32
  }
  func.func @transform_4(%arg0: i32) -> (i32, i32) {
    %c0_i32 = arith.constant 0 : i32
    %c0_i32_0 = arith.constant 0 : i32
    %c0_i32_1 = arith.constant 0 : i32
    return %c0_i32, %c0_i32_0 : i32, i32
  }
  func.func @transform_5(%arg0: i32) -> (i32, i32) {
    %c0_i32 = arith.constant 0 : i32
    %c0_i32_0 = arith.constant 0 : i32
    %c0_i32_1 = arith.constant 0 : i32
    return %c0_i32, %c0_i32_0 : i32, i32
  }
  func.func @transform_6(%arg0: i32) -> (i32, i32) {
    %c0_i32 = arith.constant 0 : i32
    %c0_i32_0 = arith.constant 0 : i32
    %c0_i32_1 = arith.constant 0 : i32
    return %c0_i32, %c0_i32_0 : i32, i32
  }
  func.func @transform_7(%arg0: i32) -> (i32, i32) {
    %c0_i32 = arith.constant 0 : i32
    %c0_i32_0 = arith.constant 0 : i32
    %c0_i32_1 = arith.constant 0 : i32
    return %c0_i32, %c0_i32_0 : i32, i32
  }
  func.func @transform_8(%arg0: i32) -> (i32, i32, i32) {
    %c0_i32 = arith.constant 0 : i32
    %c0_i32_0 = arith.constant 0 : i32
    %c0_i32_1 = arith.constant 0 : i32
    return %arg0, %c0_i32, %c0_i32_0 : i32, i32, i32
  }
}

</mosaic_0001>

<llo_original>
// kernel: tpu_custom_call.1
$region0: #{tpu_custom_call.1}
  #allocation0 [shape = 'u32[]', space=smem, size = 0x4, offset = 0x4, fixed_abs, tag = 'smem constant byte address 0x4 - core index']
  #allocation1 [shape = 'u32[72,128]{1,0:T(1,128)}', space=vmem, size = 0x9000, scoped, tag = 'internal scratch']
  %s0 = inlined_call_operand.hbm [shape: f32[2,8,32], index: 0, kind: input, shape index: {}]
  %s1 = inlined_call_operand.vmem [shape: f32[32,4], index: 1, kind: input, shape index: {}]
  %s2 = inlined_call_operand.vmem [shape: f32[4,32], index: 2, kind: input, shape index: {}]
  %s3 = inlined_call_operand.vmem [shape: f32[32,32], index: 3, kind: input, shape index: {}]
  %s4 = inlined_call_operand.hbm [shape: f32[32,32], index: 4, kind: input, shape index: {}]
  %s5 = inlined_call_operand.vmem [shape: f32[1,32], index: 5, kind: input, shape index: {}]
  %s6 = inlined_call_operand.hbm [shape: f32[32,32], index: 6, kind: input, shape index: {}]
  %s7 = inlined_call_operand.vmem [shape: f32[1,32], index: 7, kind: input, shape index: {}]
  %s8 = inlined_call_operand.hbm [shape: f32[2,1,32], index: 8, kind: output, shape index: {}]
  %s9 = sld [smem:[#allocation0]]
  $region54: #{tpu_custom_call.1} parent=0
    _
  %s11 = ssub.s32 1, %s9
  %s12 = scalar_select 0, %s11, %s9
  $region1: #{tpu_custom_call.1} parent=0
    #allocation2 [shape = 'u8[8192]{0}', space=vmem, size = 0x2000, scoped, tag = 'input window, operand 0, single buffered']
    #allocation3 [shape = 's32[1]{0}', space=sflag, size = 0x4, scoped, tag = 'scoped memory for tpu_custom_call.1']
    #allocation4 [shape = 's32[1]{0}', space=sflag, size = 0x4, scoped, tag = 'scoped memory for tpu_custom_call.1']
    #allocation5 [shape = 'u8[16384]{0}', space=vmem, size = 0x4000, scoped, tag = 'input window, operand 4, single buffered']
    #allocation6 [shape = 's32[1]{0}', space=sflag, size = 0x4, scoped, tag = 'scoped memory for tpu_custom_call.1']
    #allocation7 [shape = 'u8[16384]{0}', space=vmem, size = 0x4000, scoped, tag = 'input window, operand 6, single buffered']
    #allocation8 [shape = 'u8[1024]{0}', space=vmem, size = 0x400, scoped, tag = 'output window, operand 0, single buffered']
    %13 = vsyncpa [#allocation3], 0
    %14 = vsyncpa [#allocation6], 0
    %15 = vsyncpa [#allocation4], 0
    // Predicated region
    $region2: #{tpu_custom_call.1} parent=1 // pred_check
      _
    $region3: #{tpu_custom_call.1} parent=1 // pred_check_branch
      %17 = sbr.rel (0) target = $region5
    $region4: #{tpu_custom_call.1} parent=1 // pred_region
      %19 = vsyncadd [#allocation3], 0
      %s20 = sshll.u32 %s0, 4
      %s21 = int_to_ptr.hbm [resolvable:$true] %s20
      %s22 = sshll.u32 [#allocation2], 4
      %s23 = int_to_ptr.vmem [resolvable:$true] %s22
      %28 = dma.hbm_to_vmem [thread:$0]  %s21, 256, %s23, [#allocation3], 128, 128, 8
    $region5: #{tpu_custom_call.1} parent=1 // pred_fallthru
      _
    // Predicated region
    $region6: #{tpu_custom_call.1} parent=1 // pred_check
      _
    $region7: #{tpu_custom_call.1} parent=1 // pred_check_branch
      %30 = sbr.rel (0) target = $region9
    $region8: #{tpu_custom_call.1} parent=1 // pred_region
      _
    $region9: #{tpu_custom_call.1} parent=1 // pred_fallthru
      _
    // Predicated region
    $region10: #{tpu_custom_call.1} parent=1 // pred_check
      _
    $region11: #{tpu_custom_call.1} parent=1 // pred_check_branch
      %32 = sbr.rel (0) target = $region13
    $region12: #{tpu_custom_call.1} parent=1 // pred_region
      _
    $region13: #{tpu_custom_call.1} parent=1 // pred_fallthru
      _
    // Predicated region
    $region14: #{tpu_custom_call.1} parent=1 // pred_check
      _
    $region15: #{tpu_custom_call.1} parent=1 // pred_check_branch
      %34 = sbr.rel (0) target = $region17
    $region16: #{tpu_custom_call.1} parent=1 // pred_region
      _
    $region17: #{tpu_custom_call.1} parent=1 // pred_fallthru
      _
    // Predicated region
    $region18: #{tpu_custom_call.1} parent=1 // pred_check
      _
    $region19: #{tpu_custom_call.1} parent=1 // pred_check_branch
      %36 = sbr.rel (0) target = $region21
    $region20: #{tpu_custom_call.1} parent=1 // pred_region
      %38 = vsyncadd [#allocation6], 0
      %s39 = sshll.u32 %s4, 4
      %s40 = int_to_ptr.hbm [resolvable:$true] %s39
      %s41 = sshll.u32 [#allocation5], 4
      %s42 = int_to_ptr.vmem [resolvable:$true] %s41
      %47 = dma.hbm_to_vmem [thread:$0]  %s40, 512, %s42, [#allocation6], 128, 128, 8
    $region21: #{tpu_custom_call.1} parent=1 // pred_fallthru
      _
    // Predicated region
    $region22: #{tpu_custom_call.1} parent=1 // pred_check
      _
    $region23: #{tpu_custom_call.1} parent=1 // pred_check_branch
      %49 = sbr.rel (0) target = $region25
    $region24: #{tpu_custom_call.1} parent=1 // pred_region
      _
    $region25: #{tpu_custom_call.1} parent=1 // pred_fallthru
      _
    // Predicated region
    $region26: #{tpu_custom_call.1} parent=1 // pred_check
      _
    $region27: #{tpu_custom_call.1} parent=1 // pred_check_branch
      %51 = sbr.rel (0) target = $region29
    $region28: #{tpu_custom_call.1} parent=1 // pred_region
      %53 = vsyncadd [#allocation6], 0
      %s54 = sshll.u32 %s6, 4
      %s55 = int_to_ptr.hbm [resolvable:$true] %s54
      %s56 = sshll.u32 [#allocation7], 4
      %s57 = int_to_ptr.vmem [resolvable:$true] %s56
      %62 = dma.hbm_to_vmem [thread:$0]  %s55, 512, %s57, [#allocation6], 128, 128, 8
    $region29: #{tpu_custom_call.1} parent=1 // pred_fallthru
      _
    // Predicated region
    $region30: #{tpu_custom_call.1} parent=1 // pred_check
      _
    $region31: #{tpu_custom_call.1} parent=1 // pred_check_branch
      %64 = sbr.rel (0) target = $region33
    $region32: #{tpu_custom_call.1} parent=1 // pred_region
      _
    $region33: #{tpu_custom_call.1} parent=1 // pred_fallthru
      _
    // Predicated region
    $region34: #{tpu_custom_call.1} parent=1 // pred_check
      _
    $region35: #{tpu_custom_call.1} parent=1 // pred_check_branch
      %66 = sbr.rel (0) target = $region37
    $region36: #{tpu_custom_call.1} parent=1 // pred_region
      %68 = dma.done [#allocation3], 256
    $region37: #{tpu_custom_call.1} parent=1 // pred_fallthru
      _
    // Predicated region
    $region38: #{tpu_custom_call.1} parent=1 // pred_check
      _
    $region39: #{tpu_custom_call.1} parent=1 // pred_check_branch
      %70 = sbr.rel (0) target = $region41
    $region40: #{tpu_custom_call.1} parent=1 // pred_region
      %72 = dma.done [#allocation6], 512
    $region41: #{tpu_custom_call.1} parent=1 // pred_fallthru
      _
    // Predicated region
    $region42: #{tpu_custom_call.1} parent=1 // pred_check
      _
    $region43: #{tpu_custom_call.1} parent=1 // pred_check_branch
      %74 = sbr.rel (0) target = $region45
    $region44: #{tpu_custom_call.1} parent=1 // pred_region
      %76 = dma.done [#allocation6], 512
    $region45: #{tpu_custom_call.1} parent=1 // pred_fallthru
      _
    %v77 = vld [vmem:[#allocation2] sm:$0xff]
    %v78 = vld [vmem:[#allocation2 + $0x8] sm:$0xff]
    %v79 = vld [vmem:[%s3] sm:$0xff]
    %v80 = vld [vmem:[%s3 + $0x8] sm:$0xff]
    %v81 = vld [vmem:[%s3 + $0x10] sm:$0xff]
    %v82 = vld [vmem:[%s3 + $0x18] sm:$0xff]
    %vm83 = vcmask 261120
    %v85 = vsel %vm83, %v77, 0
    %v88 = vsel %vm83, %v78, 0
    %90 = vmatpush.msra.mxu0 0.0
    %91 = vmatpush.msra.mxu0 0.0
    %92 = vmatpush.msra.mxu0 0.0
    %93 = vmatpush.msra.mxu0 0.0
    %94 = vmatpush.msra.mxu0 0.0
    %95 = vmatpush.msra.mxu0 0.0
    %96 = vmatpush.msra.mxu0 0.0
    %97 = vmatpush.msra.mxu0 0.0
    %98 = vmatpush.msra.mxu0 0.0
    %99 = vmatpush.msra.mxu0 0.0
    %100 = vmatpush.msra.mxu0 0.0
    %101 = vmatpush.msra.mxu0 0.0
    %102 = vmatpush.msra.mxu0 %v82
    %103 = vmatpush.msra.mxu0 %v81
    %104 = vmatpush.msra.mxu0 %v80
    %105 = vmatpush.msra.mxu0 %v79
    %106 = vmatmul.f32.gmra.mxu0 %v85
    %v107 = vpop.f32.mrf.mxu0
    %v108 = vadd.f32 0.0, %v107
    %109 = vmatmul.f32.gmra.mxu0 %v88
    %v110 = vpop.f32.mrf.mxu0
    %v111 = vadd.f32 0.0, %v110
    %112 = vdwg.mxu0
    %v113 = vld [vmem:[#allocation5] sm:$0xff]
    %v114 = vld [vmem:[#allocation5 + $0x8] sm:$0xff]
    %v115 = vld [vmem:[#allocation5 + $0x10] sm:$0xff]
    %v116 = vld [vmem:[#allocation5 + $0x18] sm:$0xff]
    %v117 = vld [vmem:[%s5] sm:$0x1]
    %v119 = vperm.slane %v117, 0
    %121 = vmatpush.msra.mxu0 0.0
    %122 = vmatpush.msra.mxu0 0.0
    %123 = vmatpush.msra.mxu0 0.0
    %124 = vmatpush.msra.mxu0 0.0
    %125 = vmatpush.msra.mxu0 0.0
    %126 = vmatpush.msra.mxu0 0.0
    %127 = vmatpush.msra.mxu0 0.0
    %128 = vmatpush.msra.mxu0 0.0
    %129 = vmatpush.msra.mxu0 0.0
    %130 = vmatpush.msra.mxu0 0.0
    %131 = vmatpush.msra.mxu0 0.0
    %132 = vmatpush.msra.mxu0 0.0
    %133 = vmatpush.msra.mxu0 %v116
    %134 = vmatpush.msra.mxu0 %v115
    %135 = vmatpush.msra.mxu0 %v114
    %136 = vmatpush.msra.mxu0 %v113
    %137 = vmatmul.f32.gmra.mxu0 %v85
    %v138 = vpop.f32.mrf.mxu0
    %v139 = vadd.f32 %v119, %v138
    %140 = vmatmul.f32.gmra.mxu0 %v88
    %v141 = vpop.f32.mrf.mxu0
    %v142 = vadd.f32 %v119, %v141
    %143 = vdwg.mxu0
    %v144 = vld [vmem:[%s1] sm:$0xff]
    %v145 = vld [vmem:[%s1 + $0x8] sm:$0xff]
    %v146 = vld [vmem:[%s1 + $0x10] sm:$0xff]
    %v147 = vld [vmem:[%s1 + $0x18] sm:$0xff]
    %v149 = vsel %vm83, %v108, 0
    %v152 = vsel %vm83, %v111, 0
    %154 = vmatpush.msra.mxu0 0.0
    %155 = vmatpush.msra.mxu0 0.0
    %156 = vmatpush.msra.mxu0 0.0
    %157 = vmatpush.msra.mxu0 0.0
    %158 = vmatpush.msra.mxu0 0.0
    %159 = vmatpush.msra.mxu0 0.0
    %160 = vmatpush.msra.mxu0 0.0
    %161 = vmatpush.msra.mxu0 0.0
    %162 = vmatpush.msra.mxu0 0.0
    %163 = vmatpush.msra.mxu0 0.0
    %164 = vmatpush.msra.mxu0 0.0
    %165 = vmatpush.msra.mxu0 0.0
    %166 = vmatpush.msra.mxu0 %v147
    %167 = vmatpush.msra.mxu0 %v146
    %168 = vmatpush.msra.mxu0 %v145
    %169 = vmatpush.msra.mxu0 %v144
    %170 = vmatmul.f32.gmra.mxu0 %v149
    %v171 = vpop.f32.mrf.mxu0
    %v172 = vadd.f32 0.0, %v171
    %173 = vmatmul.f32.gmra.mxu0 %v152
    %v174 = vpop.f32.mrf.mxu0
    %v175 = vadd.f32 0.0, %v174
    %176 = vdwg.mxu0
    %vm177 = vcmask 31744
    %v178 = vsel %vm177, %v172, -inf
    %v179 = vrot.slane %v178, 4
    %v180 = vmax.f32 %v178, %v179
    %v181 = vrot.slane %v180, 2
    %v182 = vmax.f32 %v180, %v181
    %v183 = vrot.slane %v182, 1
    %v184 = vmax.f32 %v182, %v183
    %v185 = vsel %vm177, %v175, -inf
    %v186 = vrot.slane %v185, 4
    %v187 = vmax.f32 %v185, %v186
    %v188 = vrot.slane %v187, 2
    %v189 = vmax.f32 %v187, %v188
    %v190 = vrot.slane %v189, 1
    %v191 = vmax.f32 %v189, %v190
    %v192 = vsub.f32 %v172, %v184
    %v193 = vsub.f32 %v175, %v191
    %v194 = vmul.f32 %v192, 1.442695
    %v195 = vpow.pop %v194
    %v196 = vmul.f32 %v193, 1.442695
    %v197 = vpow.pop %v196
    %v198 = vsel %vm177, %v195, 0.0
    %v199 = vrot.slane %v198, 4
    %v200 = vadd.f32 %v198, %v199
    %v201 = vrot.slane %v200, 2
    %v202 = vadd.f32 %v200, %v201
    %v203 = vrot.slane %v202, 1
    %v204 = vadd.f32 %v202, %v203
    %v205 = vsel %vm177, %v197, 0.0
    %v206 = vrot.slane %v205, 4
    %v207 = vadd.f32 %v205, %v206
    %v208 = vrot.slane %v207, 2
    %v209 = vadd.f32 %v207, %v208
    %v210 = vrot.slane %v209, 1
    %v211 = vadd.f32 %v209, %v210
    %v212 = vrcp.pop %v204
    %v213 = vrcp.pop %v211
    %v214 = vmul.f32 %v195, %v212
    %v215 = vmul.f32 %v197, %v213
    %v216 = vld [vmem:[%s2] sm:$0xf]
    %v218 = vsel %vm177, %v214, 0
    %v221 = vsel %vm177, %v215, 0
    %vm223 = vcmask 1043456
    %v225 = vsel %vm223, %v216, 0
    %227 = vmatpush.msra.mxu0 0.0
    %228 = vmatpush.msra.mxu0 0.0
    %229 = vmatpush.msra.mxu0 0.0
    %230 = vmatpush.msra.mxu0 0.0
    %231 = vmatpush.msra.mxu0 0.0
    %232 = vmatpush.msra.mxu0 0.0
    %233 = vmatpush.msra.mxu0 0.0
    %234 = vmatpush.msra.mxu0 0.0
    %235 = vmatpush.msra.mxu0 0.0
    %236 = vmatpush.msra.mxu0 0.0
    %237 = vmatpush.msra.mxu0 0.0
    %238 = vmatpush.msra.mxu0 0.0
    %239 = vmatpush.msra.mxu0 0.0
    %240 = vmatpush.msra.mxu0 0.0
    %241 = vmatpush.msra.mxu0 0.0
    %242 = vmatpush.msra.mxu0 %v225
    %243 = vmatmul.f32.gmra.mxu0 %v218
    %v244 = vpop.f32.mrf.mxu0
    %v245 = vadd.f32 0.0, %v244
    %246 = vmatmul.f32.gmra.mxu0 %v221
    %v247 = vpop.f32.mrf.mxu0
    %v248 = vadd.f32 0.0, %v247
    %249 = vdwg.mxu0
    %v250 = vmul.f32 %v245, %v139
    %v251 = vmul.f32 %v248, %v142
    %v252 = vsel %vm83, %v250, 0.0
    %v253 = vrot.slane %v252, 4
    %v254 = vadd.f32 %v252, %v253
    %v255 = vrot.slane %v254, 2
    %v256 = vadd.f32 %v254, %v255
    %v257 = vrot.slane %v256, 1
    %v258 = vadd.f32 %v256, %v257
    %v259 = vsel %vm83, %v251, 0.0
    %v260 = vrot.slane %v259, 4
    %v261 = vadd.f32 %v259, %v260
    %v262 = vrot.slane %v261, 2
    %v263 = vadd.f32 %v261, %v262
    %v264 = vrot.slane %v263, 1
    %v265 = vadd.f32 %v263, %v264
    %v266 = vld [vmem:[#allocation7] sm:$0xff]
    %v267 = vld [vmem:[#allocation7 + $0x8] sm:$0xff]
    %v268 = vld [vmem:[#allocation7 + $0x10] sm:$0xff]
    %v269 = vld [vmem:[#allocation7 + $0x18] sm:$0xff]
    %v270 = vld [vmem:[%s7] sm:$0x1]
    %v272 = vperm.slane %v270, 0
    %vm276 = vcmask 1041409
    %v277 = vsel %vm276, %v265, %v258
    %v278 = vsel %vm83, %v277, 0
    %280 = vmatpush.msra.mxu0 0.0
    %281 = vmatpush.msra.mxu0 0.0
    %282 = vmatpush.msra.mxu0 0.0
    %283 = vmatpush.msra.mxu0 0.0
    %284 = vmatpush.msra.mxu0 0.0
    %285 = vmatpush.msra.mxu0 0.0
    %286 = vmatpush.msra.mxu0 0.0
    %287 = vmatpush.msra.mxu0 0.0
    %288 = vmatpush.msra.mxu0 0.0
    %289 = vmatpush.msra.mxu0 0.0
    %290 = vmatpush.msra.mxu0 0.0
    %291 = vmatpush.msra.mxu0 0.0
    %292 = vmatpush.msra.mxu0 %v269
    %293 = vmatpush.msra.mxu0 %v268
    %294 = vmatpush.msra.mxu0 %v267
    %295 = vmatpush.msra.mxu0 %v266
    %296 = vmatmul.f32.gmra.mxu0 %v278
    %v297 = vpop.f32.mrf.mxu0
    %v298 = vadd.f32 %v272, %v297
    %299 = vdwg.mxu0
    %v301 = vrot.slane %v298, 1
    %vm303 = vcmask 253952
    %304 = vst.msk [vmem:[#allocation8] sm:$0x1] %vm303, %v298
    %305 = vst.msk [vmem:[#allocation8 + $0x1] sm:$0x1] %vm303, %v301
    // Predicated region
    $region46: #{tpu_custom_call.1} parent=1 // pred_check
      _
    $region47: #{tpu_custom_call.1} parent=1 // pred_check_branch
      %307 = sbr.rel (0) target = $region49
    $region48: #{tpu_custom_call.1} parent=1 // pred_region
      %309 = vsyncadd [#allocation4], 0
      %s310 = sshll.u32 [#allocation8], 4
      %s311 = int_to_ptr.vmem [resolvable:$true] %s310
      %s312 = sshll.u32 %s8, 4
      %s313 = int_to_ptr.hbm [resolvable:$true] %s312
      %318 = dma.vmem_to_hbm [thread:$0]  %s311, 32, %s313, [#allocation4], 16, 16, 1
    $region49: #{tpu_custom_call.1} parent=1 // pred_fallthru
      _
    // Predicated region
    $region50: #{tpu_custom_call.1} parent=1 // pred_check
      _
    $region51: #{tpu_custom_call.1} parent=1 // pred_check_branch
      %320 = sbr.rel (0) target = $region53
    $region52: #{tpu_custom_call.1} parent=1 // pred_region
      %322 = dma.done [#allocation4], 32
    $region53: #{tpu_custom_call.1} parent=1 // pred_fallthru
      _
    %323 = vsyncpa [#allocation3], 1
    %324 = vsyncpa [#allocation6], 1
    %325 = vsyncpa [#allocation4], 1

</llo_original>
